<compile_context>
chip_gen: v5e
topology: v5e:2x2
jax: 0.10.0
libtpu: 0.0.40
codegen_flags: <defaults>
</compile_context>

<pallas_src>
import jax
import jax.numpy as jnp
from jax.experimental import pallas as pl
from jax.experimental.pallas import tpu as pltpu


def _round_up(x, m):
    return (x + m - 1) // m * m


def _cdiv(a, b):
    return -(-a // b)


# ----------------------------- Pallas kernel --------------------------------
def qfunc_kernel(x_ref, w1t_ref, b1_ref, w2t_ref, b2_ref, w3_ref, b3_ref,
                 out_ref):
    """Transposed MLP: activations are (hid, TB) with batch on lanes."""
    f32 = jnp.float32

    # Layer 1: (hid, in_dim) @ (in_dim, TB) -> (hid, TB), f32 accumulate.
    h = jnp.dot(w1t_ref[...], x_ref[...], preferred_element_type=f32)
    h = jnp.maximum(h + b1_ref[...], 0.0)

    # Layer 2: (hid, hid) @ (hid, TB) -> (hid, TB); bf16 MXU operands.
    h = jnp.dot(w2t_ref[...], h.astype(jnp.bfloat16), preferred_element_type=f32)
    h = jnp.maximum(h + b2_ref[...], 0.0)

    # Output layer (fan-out 1): VPU multiply + sublane reduce -> lane-dense
    # (1, TB) row.  All tb q-values sit on lanes -> unmasked vector stores.
    q = jnp.sum(h * w3_ref[...], axis=0, keepdims=True) + b3_ref[...]
    out_ref[...] = q.astype(out_ref.dtype)  # (1, TB)


# ------------------------------- wrapper -------------------------------------
_MAX_TB = 4096  # fits comfortably in every generation's scoped VMEM


def _choose_tile(B, batch_tile):
    if batch_tile is not None:
        tb = _round_up(batch_tile, 256)
        return tb, _round_up(B, tb)
    # Adaptive: pick the number of tiles first, then a 256-aligned tile size,
    # so e.g. B = MAX_TB + 4 doesn't pad out by a full extra tile.
    n_tiles = max(1, _cdiv(B, _MAX_TB))
    tb = _round_up(_cdiv(B, n_tiles), 256)
    return tb, n_tiles * tb


def qfunc_forward(obs, goal, action, params, *, batch_tile=None):
    """Run the Q-function MLP in one Pallas kernel; returns q of shape [B]."""
    w1, b1, w2, b2, w3, b3 = params
    B = obs.shape[0]
    in_dim = obs.shape[-1] + goal.shape[-1] + action.shape[-1]
    hid = w1.shape[1]

    tb, b_pad = _choose_tile(B, batch_tile)

    # ---- single fused activation pass: concat + pad + bf16 cast + transpose.
    x = jnp.concatenate([obs, goal, action], axis=-1)          # (B, in_dim) f32
    if b_pad != B:
        x = jnp.pad(x, ((0, b_pad - B), (0, 0)))
    x_t = x.astype(jnp.bfloat16).T                              # (in_dim, b_pad) bf16

    # ---- resident parameters (tiny, one-time prep; f32 biases / w3, no
    #      per-grid-step casts inside the kernel).
    w1t = w1.T.astype(jnp.bfloat16)                             # (hid, in_dim)
    w2t = w2.T.astype(jnp.bfloat16)                             # (hid, hid)
    b1c = b1.reshape(hid, 1).astype(jnp.float32)                # (hid, 1)
    b2c = b2.reshape(hid, 1).astype(jnp.float32)                # (hid, 1)
    w3c = w3.reshape(hid, 1).astype(jnp.float32)                # (hid, 1) column
    b3c = b3.reshape(1, 1).astype(jnp.float32)                  # (1, 1)

    resident = lambda a: pl.BlockSpec(a.shape, lambda i: (0, 0))

    out = pl.pallas_call(
        qfunc_kernel,
        out_shape=jax.ShapeDtypeStruct((1, b_pad), jnp.float32),
        grid=(b_pad // tb,),
        in_specs=[
            pl.BlockSpec((in_dim, tb), lambda i: (0, i)),       # batch on lanes
            resident(w1t), resident(b1c),
            resident(w2t), resident(b2c),
            resident(w3c), resident(b3c),
        ],
        out_specs=pl.BlockSpec((1, tb), lambda i: (0, i)),      # lane-dense row
        compiler_params=pltpu.CompilerParams(
            dimension_semantics=("parallel",),                  # 2-TC sharding on v7x
            vmem_limit_bytes=32 * 1024 * 1024),                 # headroom if tb is raised
    )(x_t, w1t, b1c, w2t, b2c, w3c, b3c)

    return out[0, :B]   # squeeze(-1) + drop batch padding


# --------------------------- deterministic params ----------------------------
def init_params(key, obs_dim, goal_dim, act_dim, hid_size):
    input_dim = obs_dim + goal_dim + act_dim
    ks = jax.random.split(key, 6)

    def lin(kw, kb, fan_in, fan_out):
        # torch.nn.Linear default init: U(-1/sqrt(fan_in), 1/sqrt(fan_in))
        bound = 1.0 / jnp.sqrt(jnp.float32(fan_in))
        w = jax.random.uniform(kw, (fan_in, fan_out), jnp.float32, -bound, bound)
        b = jax.random.uniform(kb, (1, fan_out), jnp.float32, -bound, bound)
        return w, b

    w1, b1 = lin(ks[0], ks[1], input_dim, hid_size)
    w2, b2 = lin(ks[2], ks[3], hid_size, hid_size)
    w3, b3 = lin(ks[4], ks[5], hid_size, 1)
    return (w1, b1, w2, b2, w3, b3)


def reference_forward(obs, goal, action, params):
    w1, b1, w2, b2, w3, b3 = params
    x = jnp.concatenate([obs, goal, action], axis=-1)
    h = jnp.maximum(x @ w1 + b1, 0.0)
    h = jnp.maximum(h @ w2 + b2, 0.0)
    return jnp.squeeze(h @ w3 + b3, -1)


# ---------------------------------- main -------------------------------------
if __name__ == "__main__":
    key = jax.random.PRNGKey(0)
    k_obs, k_goal, k_act, k_par = jax.random.split(key, 4)

    # env_params: obs=16, goal=8, action=8 -> input_dim = 32; hid_size=32, n_hids=2
    B, OBS, GOAL, ACT, HID = 8, 16, 8, 8, 32

    obs = jax.random.normal(k_obs, (B, OBS), jnp.float32)
    goal = jax.random.normal(k_goal, (B, GOAL), jnp.float32)
    action = jax.random.normal(k_act, (B, ACT), jnp.float32)
    params = init_params(k_par, OBS, GOAL, ACT, HID)

    q = jax.block_until_ready(qfunc_forward(obs, goal, action, params))
    q_ref = reference_forward(obs, goal, action, params)

    assert q.shape == (B,), q.shape
    # bf16 MXU operands -> relaxed tolerance vs. the f32 reference.
    assert jnp.allclose(q, q_ref, atol=5e-2, rtol=5e-2), (q, q_ref)
    print("KERNEL_OK")
</pallas_src>

<mosaic_0001>
module attributes {stable_mosaic.version = 11 : i64} {
  func.func @qfunc_kernel(%arg0: i32, %arg1: memref<32x256xbf16, #tpu.memory_space<vmem>>, %arg2: memref<32x32xbf16, #tpu.memory_space<vmem>>, %arg3: memref<32x1xf32, #tpu.memory_space<vmem>>, %arg4: memref<32x32xbf16, #tpu.memory_space<vmem>>, %arg5: memref<32x1xf32, #tpu.memory_space<vmem>>, %arg6: memref<32x1xf32, #tpu.memory_space<vmem>>, %arg7: memref<1x1xf32, #tpu.memory_space<vmem>>, %arg8: memref<1x256xf32, #tpu.memory_space<vmem>>) attributes {dimension_semantics = [#tpu.dimension_semantics<parallel>], iteration_bounds = array<i64: 1>, scalar_prefetch = 0 : i64, scratch_operands = 0 : i64, tpu.core_type = #tpu.core_type<tc>, window_params = [{transform_indices = @transform_0, window_bounds = array<i64: 32, 256>}, {pipeline_mode = #tpu.pipeline_mode<synchronous>, transform_indices = @transform_1, window_bounds = array<i64: 32, 32>}, {pipeline_mode = #tpu.pipeline_mode<synchronous>, transform_indices = @transform_2, window_bounds = array<i64: 32, 1>}, {pipeline_mode = #tpu.pipeline_mode<synchronous>, transform_indices = @transform_3, window_bounds = array<i64: 32, 32>}, {pipeline_mode = #tpu.pipeline_mode<synchronous>, transform_indices = @transform_4, window_bounds = array<i64: 32, 1>}, {pipeline_mode = #tpu.pipeline_mode<synchronous>, transform_indices = @transform_5, window_bounds = array<i64: 32, 1>}, {pipeline_mode = #tpu.pipeline_mode<synchronous>, transform_indices = @transform_6, window_bounds = array<i64: 1, 1>}, {transform_indices = @transform_7, window_bounds = array<i64: 1, 256>}]} {
    %c0 = arith.constant 0 : index
    %c0_0 = arith.constant 0 : index
    %0 = vector.load %arg2[%c0, %c0_0] : memref<32x32xbf16, #tpu.memory_space<vmem>>, vector<32x32xbf16>
    %c0_1 = arith.constant 0 : index
    %c0_2 = arith.constant 0 : index
    %1 = vector.load %arg1[%c0_1, %c0_2] : memref<32x256xbf16, #tpu.memory_space<vmem>>, vector<32x256xbf16>
    %cst = arith.constant dense<0.000000e+00> : vector<32x256xf32>
    %2 = tpu.matmul %0, %1, %cst {dimension_numbers = #tpu.dot_dimension_numbers<[1], [0], [0], [1], [0, 0, 1, 1], [], []>} : vector<32x32xbf16>, vector<32x256xbf16>, vector<32x256xf32> -> vector<32x256xf32>
    %c0_3 = arith.constant 0 : index
    %c0_4 = arith.constant 0 : index
    %3 = vector.load %arg3[%c0_3, %c0_4] : memref<32x1xf32, #tpu.memory_space<vmem>>, vector<32x1xf32>
    %4 = vector.broadcast %3 : vector<32x1xf32> to vector<32x256xf32>
    %5 = arith.addf %2, %4 : vector<32x256xf32>
    %cst_5 = arith.constant 0.000000e+00 : f32
    %6 = vector.broadcast %cst_5 : f32 to vector<32x256xf32>
    %7 = arith.maximumf %5, %6 : vector<32x256xf32>
    %c0_6 = arith.constant 0 : index
    %c0_7 = arith.constant 0 : index
    %8 = vector.load %arg4[%c0_6, %c0_7] : memref<32x32xbf16, #tpu.memory_space<vmem>>, vector<32x32xbf16>
    %9 = arith.truncf %7 : vector<32x256xf32> to vector<32x256xbf16>
    %cst_8 = arith.constant dense<0.000000e+00> : vector<32x256xf32>
    %10 = tpu.matmul %8, %9, %cst_8 {dimension_numbers = #tpu.dot_dimension_numbers<[1], [0], [0], [1], [0, 0, 1, 1], [], []>} : vector<32x32xbf16>, vector<32x256xbf16>, vector<32x256xf32> -> vector<32x256xf32>
    %c0_9 = arith.constant 0 : index
    %c0_10 = arith.constant 0 : index
    %11 = vector.load %arg5[%c0_9, %c0_10] : memref<32x1xf32, #tpu.memory_space<vmem>>, vector<32x1xf32>
    %12 = vector.broadcast %11 : vector<32x1xf32> to vector<32x256xf32>
    %13 = arith.addf %10, %12 : vector<32x256xf32>
    %cst_11 = arith.constant 0.000000e+00 : f32
    %14 = vector.broadcast %cst_11 : f32 to vector<32x256xf32>
    %15 = arith.maximumf %13, %14 : vector<32x256xf32>
    %c0_12 = arith.constant 0 : index
    %c0_13 = arith.constant 0 : index
    %16 = vector.load %arg6[%c0_12, %c0_13] : memref<32x1xf32, #tpu.memory_space<vmem>>, vector<32x1xf32>
    %17 = vector.broadcast %16 : vector<32x1xf32> to vector<32x256xf32>
    %18 = arith.mulf %15, %17 : vector<32x256xf32>
    %cst_14 = arith.constant dense<0.000000e+00> : vector<256xf32>
    %19 = vector.multi_reduction <add>, %18, %cst_14 [0] : vector<32x256xf32> to vector<256xf32>
    %20 = vector.shape_cast %19 : vector<256xf32> to vector<1x256xf32>
    %c0_15 = arith.constant 0 : index
    %c0_16 = arith.constant 0 : index
    %21 = vector.load %arg7[%c0_15, %c0_16] : memref<1x1xf32, #tpu.memory_space<vmem>>, vector<1x1xf32>
    %22 = vector.broadcast %21 : vector<1x1xf32> to vector<1x256xf32>
    %23 = arith.addf %20, %22 : vector<1x256xf32>
    %c0_17 = arith.constant 0 : index
    %c0_18 = arith.constant 0 : index
    %24 = vector.load %arg8[%c0_17, %c0_18] : memref<1x256xf32, #tpu.memory_space<vmem>>, vector<1x256xf32>
    tpu.vector_store %arg8[%c0_17, %c0_18], %23 {strides = array<i32>} : memref<1x256xf32, #tpu.memory_space<vmem>>, vector<1x256xf32>,
    return
  }
  func.func @transform_0(%arg0: i32) -> (i32, i32) {
    %c0_i32 = arith.constant 0 : i32
    %c0_i32_0 = arith.constant 0 : i32
    return %c0_i32, %arg0 : i32, i32
  }
  func.func @transform_1(%arg0: i32) -> (i32, i32) {
    %c0_i32 = arith.constant 0 : i32
    %c0_i32_0 = arith.constant 0 : i32
    %c0_i32_1 = arith.constant 0 : i32
    return %c0_i32, %c0_i32_0 : i32, i32
  }
  func.func @transform_2(%arg0: i32) -> (i32, i32) {
    %c0_i32 = arith.constant 0 : i32
    %c0_i32_0 = arith.constant 0 : i32
    %c0_i32_1 = arith.constant 0 : i32
    return %c0_i32, %c0_i32_0 : i32, i32
  }
  func.func @transform_3(%arg0: i32) -> (i32, i32) {
    %c0_i32 = arith.constant 0 : i32
    %c0_i32_0 = arith.constant 0 : i32
    %c0_i32_1 = arith.constant 0 : i32
    return %c0_i32, %c0_i32_0 : i32, i32
  }
  func.func @transform_4(%arg0: i32) -> (i32, i32) {
    %c0_i32 = arith.constant 0 : i32
    %c0_i32_0 = arith.constant 0 : i32
    %c0_i32_1 = arith.constant 0 : i32
    return %c0_i32, %c0_i32_0 : i32, i32
  }
  func.func @transform_5(%arg0: i32) -> (i32, i32) {
    %c0_i32 = arith.constant 0 : i32
    %c0_i32_0 = arith.constant 0 : i32
    %c0_i32_1 = arith.constant 0 : i32
    return %c0_i32, %c0_i32_0 : i32, i32
  }
  func.func @transform_6(%arg0: i32) -> (i32, i32) {
    %c0_i32 = arith.constant 0 : i32
    %c0_i32_0 = arith.constant 0 : i32
    %c0_i32_1 = arith.constant 0 : i32
    return %c0_i32, %c0_i32_0 : i32, i32
  }
  func.func @transform_7(%arg0: i32) -> (i32, i32) {
    %c0_i32 = arith.constant 0 : i32
    %c0_i32_0 = arith.constant 0 : i32
    return %c0_i32, %arg0 : i32, i32
  }
}

</mosaic_0001>

<llo_original>
// kernel: tpu_custom_call.1
$region0: #{tpu_custom_call.1}
  #allocation0 [shape = 'u32[]', space=smem, size = 0x4, offset = 0x4, fixed_abs, tag = 'smem constant byte address 0x4 - core index']
  #allocation1 [shape = 'u32[72,128]{1,0:T(1,128)}', space=vmem, size = 0x9000, scoped, tag = 'internal scratch']
  #allocation2 [shape = 'f32[1,1]{1,0:T(1,128)S(1)}', space=vmem, size = 0x200, scoped, tag = 'scoped memory for tpu_custom_call.1']
  %s0 = inlined_call_operand.vmem [shape: bf16[32,256], index: 0, kind: input, shape index: {}]
  %s1 = inlined_call_operand.vmem [shape: bf16[32,32], index: 1, kind: input, shape index: {}]
  %s2 = inlined_call_operand.vmem [shape: f32[32,1], index: 2, kind: input, shape index: {}]
  %s3 = inlined_call_operand.vmem [shape: bf16[32,32], index: 3, kind: input, shape index: {}]
  %s4 = inlined_call_operand.vmem [shape: f32[32,1], index: 4, kind: input, shape index: {}]
  %s5 = inlined_call_operand.vmem [shape: f32[32,1], index: 5, kind: input, shape index: {}]
  %s6 = inlined_call_operand.<no memory space> [shape: f32[1,1], index: 6, kind: input, shape index: {}]
  %s7 = inlined_call_operand.hbm [shape: f32[1,256], index: 7, kind: output, shape index: {}]
  %s8 = sld [smem:[#allocation0]]
  $region38: #{tpu_custom_call.1} parent=0
    _
  %s10 = ssub.s32 1, %s8
  %s11 = scalar_select 0, %s10, %s8
  %v12 = vstv %s6
  %13 = vst [vmem:[#allocation2] sm:$0x1] %v12
  $region1: #{tpu_custom_call.1} parent=0
    #allocation3 [shape = 'u8[1024]{0}', space=vmem, size = 0x400, scoped, tag = 'output window, operand 0, single buffered']
    #allocation4 [shape = 's32[1]{0}', space=sflag, size = 0x4, scoped, tag = 'scoped memory for tpu_custom_call.1']
    %14 = vsyncpa [#allocation4], 0
    // Predicated region
    $region2: #{tpu_custom_call.1} parent=1 // pred_check
      _
    $region3: #{tpu_custom_call.1} parent=1 // pred_check_branch
      %16 = sbr.rel (0) target = $region5
    $region4: #{tpu_custom_call.1} parent=1 // pred_region
      _
    $region5: #{tpu_custom_call.1} parent=1 // pred_fallthru
      _
    // Predicated region
    $region6: #{tpu_custom_call.1} parent=1 // pred_check
      _
    $region7: #{tpu_custom_call.1} parent=1 // pred_check_branch
      %18 = sbr.rel (0) target = $region9
    $region8: #{tpu_custom_call.1} parent=1 // pred_region
      _
    $region9: #{tpu_custom_call.1} parent=1 // pred_fallthru
      _
    // Predicated region
    $region10: #{tpu_custom_call.1} parent=1 // pred_check
      _
    $region11: #{tpu_custom_call.1} parent=1 // pred_check_branch
      %20 = sbr.rel (0) target = $region13
    $region12: #{tpu_custom_call.1} parent=1 // pred_region
      _
    $region13: #{tpu_custom_call.1} parent=1 // pred_fallthru
      _
    // Predicated region
    $region14: #{tpu_custom_call.1} parent=1 // pred_check
      _
    $region15: #{tpu_custom_call.1} parent=1 // pred_check_branch
      %22 = sbr.rel (0) target = $region17
    $region16: #{tpu_custom_call.1} parent=1 // pred_region
      _
    $region17: #{tpu_custom_call.1} parent=1 // pred_fallthru
      _
    // Predicated region
    $region18: #{tpu_custom_call.1} parent=1 // pred_check
      _
    $region19: #{tpu_custom_call.1} parent=1 // pred_check_branch
      %24 = sbr.rel (0) target = $region21
    $region20: #{tpu_custom_call.1} parent=1 // pred_region
      _
    $region21: #{tpu_custom_call.1} parent=1 // pred_fallthru
      _
    // Predicated region
    $region22: #{tpu_custom_call.1} parent=1 // pred_check
      _
    $region23: #{tpu_custom_call.1} parent=1 // pred_check_branch
      %26 = sbr.rel (0) target = $region25
    $region24: #{tpu_custom_call.1} parent=1 // pred_region
      _
    $region25: #{tpu_custom_call.1} parent=1 // pred_fallthru
      _
    // Predicated region
    $region26: #{tpu_custom_call.1} parent=1 // pred_check
      _
    $region27: #{tpu_custom_call.1} parent=1 // pred_check_branch
      %28 = sbr.rel (0) target = $region29
    $region28: #{tpu_custom_call.1} parent=1 // pred_region
      _
    $region29: #{tpu_custom_call.1} parent=1 // pred_fallthru
      _
    %v30 = vld [vmem:[%s1] sm:$0xf]
    %v31 = vld [vmem:[%s1 + $0x4] sm:$0xf]
    %v32 = vld [vmem:[%s1 + $0x8] sm:$0xf]
    %v33 = vld [vmem:[%s1 + $0xc] sm:$0xf]
    %v34 = vld [vmem:[%s0] sm:$0xff]
    %v35 = vld [vmem:[%s0 + $0x8] sm:$0xff]
    %v36 = vld [vmem:[%s0 + $0x10] sm:$0xff]
    %v37 = vld [vmem:[%s0 + $0x18] sm:$0xff]
    %v38 = vld [vmem:[%s2] sm:$0xff]
    %v39 = vld [vmem:[%s2 + $0x8] sm:$0xff]
    %v40 = vld [vmem:[%s2 + $0x10] sm:$0xff]
    %v41 = vld [vmem:[%s2 + $0x18] sm:$0xff]
    %43 = vset.pattern.permute.xlu0 0
    %44 = vperm.xlu0 %43, %v38
    %v45 = vpop.permute.xlu0 %44
    %48 = vset.pattern.permute.xlu0 0
    %49 = vperm.xlu0 %48, %v39
    %v50 = vpop.permute.xlu0 %49
    %53 = vset.pattern.permute.xlu0 0
    %54 = vperm.xlu0 %53, %v40
    %v55 = vpop.permute.xlu0 %54
    %58 = vset.pattern.permute.xlu0 0
    %59 = vperm.xlu0 %58, %v41
    %v60 = vpop.permute.xlu0 %59
    %v66 = vunpack.c.l.b16 %v30
    %v67 = vunpack.c.l.b16 %v31
    %v68 = vunpack.c.l.b16 %v32
    %v69 = vunpack.c.l.b16 %v33
    %v70 = vpack.c.b16 %v67, %v66
    %v71 = vpack.c.b16 %v69, %v68
    %v76 = vunpack.c.l.b16 %v34
    %v77 = vunpack.c.h.b16 %v34
    %v78 = vunpack.c.l.b16 %v35
    %v79 = vunpack.c.h.b16 %v35
    %v80 = vunpack.c.l.b16 %v36
    %v81 = vunpack.c.h.b16 %v36
    %v82 = vunpack.c.l.b16 %v37
    %v83 = vunpack.c.h.b16 %v37
    %v84 = vpack.c.b16 %v78, %v76
    %v85 = vpack.c.b16 %v79, %v77
    %v86 = vpack.c.b16 %v82, %v80
    %v87 = vpack.c.b16 %v83, %v81
    %vm92 = vcmask 261120
    %v94 = vsel %vm92, %v70, 0
    %v97 = vsel %vm92, %v71, 0
    %99 = vmatpush.bf16.msra.mxu0 0
    %100 = vmatpush.bf16.msra.mxu0 0
    %101 = vmatpush.bf16.msra.mxu0 0
    %102 = vmatpush.bf16.msra.mxu0 0
    %103 = vmatpush.bf16.msra.mxu0 0
    %104 = vmatpush.bf16.msra.mxu0 0
    %105 = vmatpush.bf16.msra.mxu0 %v86
    %106 = vmatpush.bf16.msra.mxu0 %v84
    %107 = vmatmul.bf16.gmra.mxu0 %v94
    %v108 = vpop.f32.mrf.mxu0
    %v109 = vadd.f32 %v45, %v108
    %v110 = vpop.f32.mrf.mxu0
    %v111 = vadd.f32 %v50, %v110
    %112 = vmatmul.bf16.gmra.mxu0 %v97
    %v113 = vpop.f32.mrf.mxu0
    %v114 = vadd.f32 %v55, %v113
    %v115 = vpop.f32.mrf.mxu0
    %v116 = vadd.f32 %v60, %v115
    %117 = vdwg.mxu0
    %118 = vmatpush.bf16.msra.mxu0 0
    %119 = vmatpush.bf16.msra.mxu0 0
    %120 = vmatpush.bf16.msra.mxu0 0
    %121 = vmatpush.bf16.msra.mxu0 0
    %122 = vmatpush.bf16.msra.mxu0 0
    %123 = vmatpush.bf16.msra.mxu0 0
    %124 = vmatpush.bf16.msra.mxu0 %v87
    %125 = vmatpush.bf16.msra.mxu0 %v85
    %126 = vmatmul.bf16.gmra.mxu0 %v94
    %v127 = vpop.f32.mrf.mxu0
    %v128 = vadd.f32 %v45, %v127
    %v129 = vpop.f32.mrf.mxu0
    %v130 = vadd.f32 %v50, %v129
    %131 = vmatmul.bf16.gmra.mxu0 %v97
    %v132 = vpop.f32.mrf.mxu0
    %v133 = vadd.f32 %v55, %v132
    %v134 = vpop.f32.mrf.mxu0
    %v135 = vadd.f32 %v60, %v134
    %136 = vdwg.mxu0
    %v137 = vmax.f32 %v109, 0.0
    %v138 = vmax.f32 %v128, 0.0
    %v139 = vmax.f32 %v111, 0.0
    %v140 = vmax.f32 %v130, 0.0
    %v141 = vmax.f32 %v114, 0.0
    %v142 = vmax.f32 %v133, 0.0
    %v143 = vmax.f32 %v116, 0.0
    %v144 = vmax.f32 %v135, 0.0
    %v145 = vld [vmem:[%s3] sm:$0xf]
    %v146 = vld [vmem:[%s3 + $0x4] sm:$0xf]
    %v147 = vld [vmem:[%s3 + $0x8] sm:$0xf]
    %v148 = vld [vmem:[%s3 + $0xc] sm:$0xf]
    %v149 = vpack.c.bf16 %v139, %v137
    %v150 = vpack.c.bf16 %v140, %v138
    %v151 = vpack.c.bf16 %v143, %v141
    %v152 = vpack.c.bf16 %v144, %v142
    %v153 = vld [vmem:[%s4] sm:$0xff]
    %v154 = vld [vmem:[%s4 + $0x8] sm:$0xff]
    %v155 = vld [vmem:[%s4 + $0x10] sm:$0xff]
    %v156 = vld [vmem:[%s4 + $0x18] sm:$0xff]
    %158 = vset.pattern.permute.xlu0 0
    %159 = vperm.xlu0 %158, %v153
    %v160 = vpop.permute.xlu0 %159
    %163 = vset.pattern.permute.xlu0 0
    %164 = vperm.xlu0 %163, %v154
    %v165 = vpop.permute.xlu0 %164
    %168 = vset.pattern.permute.xlu0 0
    %169 = vperm.xlu0 %168, %v155
    %v170 = vpop.permute.xlu0 %169
    %173 = vset.pattern.permute.xlu0 0
    %174 = vperm.xlu0 %173, %v156
    %v175 = vpop.permute.xlu0 %174
    %v181 = vunpack.c.l.b16 %v145
    %v182 = vunpack.c.l.b16 %v146
    %v183 = vunpack.c.l.b16 %v147
    %v184 = vunpack.c.l.b16 %v148
    %v185 = vpack.c.b16 %v182, %v181
    %v186 = vpack.c.b16 %v184, %v183
    %v188 = vsel %vm92, %v185, 0
    %v191 = vsel %vm92, %v186, 0
    %193 = vmatpush.bf16.msra.mxu0 0
    %194 = vmatpush.bf16.msra.mxu0 0
    %195 = vmatpush.bf16.msra.mxu0 0
    %196 = vmatpush.bf16.msra.mxu0 0
    %197 = vmatpush.bf16.msra.mxu0 0
    %198 = vmatpush.bf16.msra.mxu0 0
    %199 = vmatpush.bf16.msra.mxu0 %v151
    %200 = vmatpush.bf16.msra.mxu0 %v149
    %201 = vmatmul.bf16.gmra.mxu0 %v188
    %v202 = vpop.f32.mrf.mxu0
    %v203 = vadd.f32 %v160, %v202
    %v204 = vpop.f32.mrf.mxu0
    %v205 = vadd.f32 %v165, %v204
    %206 = vmatmul.bf16.gmra.mxu0 %v191
    %v207 = vpop.f32.mrf.mxu0
    %v208 = vadd.f32 %v170, %v207
    %v209 = vpop.f32.mrf.mxu0
    %v210 = vadd.f32 %v175, %v209
    %211 = vdwg.mxu0
    %212 = vmatpush.bf16.msra.mxu0 0
    %213 = vmatpush.bf16.msra.mxu0 0
    %214 = vmatpush.bf16.msra.mxu0 0
    %215 = vmatpush.bf16.msra.mxu0 0
    %216 = vmatpush.bf16.msra.mxu0 0
    %217 = vmatpush.bf16.msra.mxu0 0
    %218 = vmatpush.bf16.msra.mxu0 %v152
    %219 = vmatpush.bf16.msra.mxu0 %v150
    %220 = vmatmul.bf16.gmra.mxu0 %v188
    %v221 = vpop.f32.mrf.mxu0
    %v222 = vadd.f32 %v160, %v221
    %v223 = vpop.f32.mrf.mxu0
    %v224 = vadd.f32 %v165, %v223
    %225 = vmatmul.bf16.gmra.mxu0 %v191
    %v226 = vpop.f32.mrf.mxu0
    %v227 = vadd.f32 %v170, %v226
    %v228 = vpop.f32.mrf.mxu0
    %v229 = vadd.f32 %v175, %v228
    %230 = vdwg.mxu0
    %v231 = vmax.f32 %v203, 0.0
    %v232 = vmax.f32 %v222, 0.0
    %v233 = vmax.f32 %v205, 0.0
    %v234 = vmax.f32 %v224, 0.0
    %v235 = vmax.f32 %v208, 0.0
    %v236 = vmax.f32 %v227, 0.0
    %v237 = vmax.f32 %v210, 0.0
    %v238 = vmax.f32 %v229, 0.0
    %v239 = vld [vmem:[%s5] sm:$0xff]
    %v240 = vld [vmem:[%s5 + $0x8] sm:$0xff]
    %v241 = vld [vmem:[%s5 + $0x10] sm:$0xff]
    %v242 = vld [vmem:[%s5 + $0x18] sm:$0xff]
    %244 = vset.pattern.permute.xlu0 0
    %245 = vperm.xlu0 %244, %v239
    %v246 = vpop.permute.xlu0 %245
    %249 = vset.pattern.permute.xlu0 0
    %250 = vperm.xlu0 %249, %v240
    %v251 = vpop.permute.xlu0 %250
    %254 = vset.pattern.permute.xlu0 0
    %255 = vperm.xlu0 %254, %v241
    %v256 = vpop.permute.xlu0 %255
    %259 = vset.pattern.permute.xlu0 0
    %260 = vperm.xlu0 %259, %v242
    %v261 = vpop.permute.xlu0 %260
    %v263 = vmul.f32 %v231, %v246
    %v264 = vmul.f32 %v232, %v246
    %v265 = vmul.f32 %v233, %v251
    %v266 = vmul.f32 %v234, %v251
    %v267 = vmul.f32 %v235, %v256
    %v268 = vmul.f32 %v236, %v256
    %v269 = vmul.f32 %v237, %v261
    %v270 = vmul.f32 %v238, %v261
    %v271 = vadd.f32 %v263, %v265
    %v272 = vadd.f32 %v271, %v267
    %v273 = vadd.f32 %v272, %v269
    %v274 = vrot.slane %v273, 4
    %v275 = vadd.f32 %v273, %v274
    %v276 = vrot.slane %v275, 2
    %v277 = vadd.f32 %v275, %v276
    %v278 = vrot.slane %v277, 1
    %v279 = vadd.f32 %v277, %v278
    %v280 = vadd.f32 %v264, %v266
    %v281 = vadd.f32 %v280, %v268
    %v282 = vadd.f32 %v281, %v270
    %v283 = vrot.slane %v282, 4
    %v284 = vadd.f32 %v282, %v283
    %v285 = vrot.slane %v284, 2
    %v286 = vadd.f32 %v284, %v285
    %v287 = vrot.slane %v286, 1
    %v288 = vadd.f32 %v286, %v287
    %v289 = vld [vmem:[#allocation2] sm:$0x1]
    %291 = vset.pattern.permute.xlu0 0
    %292 = vperm.xlu0 %291, %v289
    %v293 = vpop.permute.xlu0 %292
    %v295 = vperm.slane %v293, 0
    %v296 = vadd.f32 %v279, %v295
    %v297 = vadd.f32 %v288, %v295
    %v300 = vrot.slane %v297, 7
    %vm301 = vcmask 1040384
    %v302 = vsel %vm301, %v296, %v300
    %v304 = vlaneseq
    %vm305 = vcmp.ge.s32.totalorder %v304, 0
    %vm306 = vcmp.lt.s32.totalorder %v304, 256
    %vm307 = vmand %vm305, %vm306
    %308 = vst.msk [vmem:[#allocation3] sm:$0x3] %vm307, %v302
    // Predicated region
    $region30: #{tpu_custom_call.1} parent=1 // pred_check
      _
    $region31: #{tpu_custom_call.1} parent=1 // pred_check_branch
      %310 = sbr.rel (0) target = $region33
    $region32: #{tpu_custom_call.1} parent=1 // pred_region
      %312 = vsyncadd [#allocation4], 0
      %s314 = sshll.u32 [#allocation3], 4
      %s315 = int_to_ptr.vmem [resolvable:$true] %s314
      %s316 = sshll.u32 %s7, 4
      %s317 = int_to_ptr.hbm [resolvable:$true] %s316
      %319 = dma.vmem_to_hbm [thread:$0]  %s315, 32, %s317, [#allocation4]
    $region33: #{tpu_custom_call.1} parent=1 // pred_fallthru
      _
    // Predicated region
    $region34: #{tpu_custom_call.1} parent=1 // pred_check
      _
    $region35: #{tpu_custom_call.1} parent=1 // pred_check_branch
      %321 = sbr.rel (0) target = $region37
    $region36: #{tpu_custom_call.1} parent=1 // pred_region
      %323 = dma.done [#allocation4], 32
    $region37: #{tpu_custom_call.1} parent=1 // pred_fallthru
      _
    %324 = vsyncpa [#allocation4], 1

</llo_original>
